<compile_context>
chip_gen: v7x
topology: tpu7x:2x2x1
jax: 0.10.0
libtpu: 0.0.40
codegen_flags: <defaults>
</compile_context>

<pallas_src>
import jax
import jax.numpy as jnp
from jax.experimental import pallas as pl
from jax.experimental.pallas import tpu as pltpu

_LANE_CANDIDATES = (2048, 1024, 512, 256, 128)
_TARGET_TILE_BYTES = 4 * 1024 * 1024      # per-operand block (4 bufs -> ~16 MiB VMEM)
_VMEM_LIMIT_BYTES = 32 * 1024 * 1024      # safe scoped limit on v5e / v6e / v7x


def _zero_mean_kernel(x_ref, o_ref):
    # Pure VPU elementwise shift on the whole VMEM tile.
    o_ref[...] = x_ref[...] - jnp.asarray(0.5, dtype=x_ref.dtype)


def _sublane_multiple(dtype):
    itemsize = jnp.dtype(dtype).itemsize
    return {4: 8, 2: 16, 1: 32}.get(itemsize, 8)


def _pick_layout(n, dtype):
    """Return (lanes, rows, tile_rows, pad_elems).  pad_elems == 0 on the fast path."""
    itemsize = jnp.dtype(dtype).itemsize
    sub = _sublane_multiple(dtype)

    # Fast path: no padding -- widest lane count that divides n exactly.
    for lanes in _LANE_CANDIDATES:
        if n % lanes:
            continue
        rows = n // lanes
        if rows * lanes * itemsize <= _TARGET_TILE_BYTES:
            # Single block; last-two dims equal the full array dims (always legal).
            return lanes, rows, rows, 0
        target_rows = max(sub, _TARGET_TILE_BYTES // (lanes * itemsize))
        tr = min(rows, target_rows)
        tr -= tr % sub
        while tr >= sub and rows % tr:
            tr -= sub
        if tr >= sub:
            return lanes, rows, tr, 0

    # Fallback: single fused pad to a lane-aligned slab (rare, odd sizes).
    lanes = 128
    rows_needed = -(-n // lanes)
    target_rows = max(sub, _TARGET_TILE_BYTES // (lanes * itemsize))
    target_rows -= target_rows % sub
    if rows_needed <= target_rows:
        rows = rows_needed          # one block == full dims -> no alignment needed
        tr = rows
    else:
        tr = target_rows
        rows = -(-rows_needed // tr) * tr
    return lanes, rows, tr, rows * lanes - n


def zero_mean_transform(x, logpx=None):
    """Pallas equivalent of ZeroMeanTransform.forward: (x - 0.5[, logpx])."""
    orig_shape = x.shape
    dtype = x.dtype
    n = x.size

    lanes, rows, tr, pad = _pick_layout(n, dtype)

    flat = x.reshape(-1)                      # free for a contiguous array
    if pad:
        flat = jnp.pad(flat, (0, pad))        # single fused pad (rare path only)
    x2d = flat.reshape(rows, lanes)

    out2d = pl.pallas_call(
        _zero_mean_kernel,
        out_shape=jax.ShapeDtypeStruct((rows, lanes), dtype),
        grid_spec=pltpu.PrefetchScalarGridSpec(
            num_scalar_prefetch=0,
            grid=(rows // tr,),
            in_specs=[pl.BlockSpec((tr, lanes), lambda i: (i, 0))],
            out_specs=pl.BlockSpec((tr, lanes), lambda i: (i, 0)),
        ),
        compiler_params=pltpu.CompilerParams(
            dimension_semantics=("parallel",),
            vmem_limit_bytes=_VMEM_LIMIT_BYTES,
        ),
        cost_estimate=pl.CostEstimate(
            flops=n, transcendentals=0, bytes_accessed=2 * x.nbytes),
    )(x2d)

    if pad:
        out = out2d.reshape(-1)[:n].reshape(orig_shape)
    else:
        out = out2d.reshape(orig_shape)

    if logpx is None:
        return out
    return (out, logpx)


if __name__ == "__main__":
    key = jax.random.PRNGKey(0)
    k1, k2, k3, k4 = jax.random.split(key, 4)

    # 1) Small NCHW f32 input, with and without logpx (module's canonical use).
    x = jax.random.uniform(k1, (2, 4, 16, 16), dtype=jnp.float32)
    logpx = jax.random.normal(k2, (2, 1), dtype=jnp.float32)

    y = jax.block_until_ready(zero_mean_transform(x))
    assert y.shape == x.shape and y.dtype == x.dtype
    assert jnp.allclose(y, x - 0.5, atol=1e-6)

    y2, lp = zero_mean_transform(x, logpx)
    jax.block_until_ready((y2, lp))
    assert jnp.allclose(y2, x - 0.5, atol=1e-6)
    assert jnp.array_equal(lp, logpx)

    # 2) bf16 input (exercises dtype-aware sublane handling).
    xb = jax.random.uniform(k3, (2, 3, 16, 16), dtype=jnp.float32).astype(jnp.bfloat16)
    yb = jax.block_until_ready(zero_mean_transform(xb))
    assert yb.dtype == jnp.bfloat16
    assert jnp.allclose(yb.astype(jnp.float32), (xb - 0.5).astype(jnp.float32), atol=1e-2)

    # 3) Larger f32 input that exercises the multi-block (tiled, pad-free) path.
    xl = jax.random.uniform(k4, (16, 8, 128, 128), dtype=jnp.float32)
    yl = jax.block_until_ready(zero_mean_transform(xl))
    assert jnp.allclose(yl, xl - 0.5, atol=1e-6)

    print("KERNEL_OK")
</pallas_src>

<mosaic_0001>
module attributes {stable_mosaic.version = 11 : i64} {
  func.func @_zero_mean_kernel(%arg0: i32, %arg1: memref<1x2048xf32, #tpu.memory_space<vmem>>, %arg2: memref<1x2048xf32, #tpu.memory_space<vmem>>) attributes {dimension_semantics = [#tpu.dimension_semantics<parallel>], iteration_bounds = array<i64: 1>, scalar_prefetch = 0 : i64, scratch_operands = 0 : i64, tpu.core_type = #tpu.core_type<tc>, window_params = [{transform_indices = @transform_0, window_bounds = array<i64: 1, 2048>}, {transform_indices = @transform_1, window_bounds = array<i64: 1, 2048>}]} {
    %c0 = arith.constant 0 : index
    %c0_0 = arith.constant 0 : index
    %0 = vector.load %arg1[%c0, %c0_0] : memref<1x2048xf32, #tpu.memory_space<vmem>>, vector<1x2048xf32>
    %cst = arith.constant 5.000000e-01 : f32
    %1 = vector.broadcast %cst : f32 to vector<1x2048xf32>
    %2 = arith.subf %0, %1 : vector<1x2048xf32>
    %c0_1 = arith.constant 0 : index
    %c0_2 = arith.constant 0 : index
    %3 = vector.load %arg2[%c0_1, %c0_2] : memref<1x2048xf32, #tpu.memory_space<vmem>>, vector<1x2048xf32>
    tpu.vector_store %arg2[%c0_1, %c0_2], %2 {strides = array<i32>} : memref<1x2048xf32, #tpu.memory_space<vmem>>, vector<1x2048xf32>,
    return
  }
  func.func @transform_0(%arg0: i32) -> (i32, i32) {
    %c0_i32 = arith.constant 0 : i32
    %c0_i32_0 = arith.constant 0 : i32
    return %arg0, %c0_i32 : i32, i32
  }
  func.func @transform_1(%arg0: i32) -> (i32, i32) {
    %c0_i32 = arith.constant 0 : i32
    %c0_i32_0 = arith.constant 0 : i32
    return %arg0, %c0_i32 : i32, i32
  }
}

</mosaic_0001>

<llo_original>
// kernel: tpu_custom_call.1
$region0: #{tpu_custom_call.1}
  #allocation0 [shape = 'u32[]', space=smem, size = 0x4, offset = 0x4, fixed_abs, tag = 'smem constant byte address 0x4 - core index']
  #allocation1 [shape = 'u32[144,128]{1,0:T(1,128)}', space=vmem, size = 0x12000, scoped, tag = 'internal scratch']
  %s0 = inlined_call_operand.hbm [shape: f32[1,2048], index: 0, kind: input, shape index: {}]
  %s1 = inlined_call_operand.hbm [shape: f32[1,2048], index: 1, kind: output, shape index: {}]
  %s2 = sld [smem:[#allocation0]]
  $region18: #{tpu_custom_call.1} parent=0
    _
  %s4 = ssub.s32 1, %s2
  %s5 = scalar_select 0, %s4, %s2
  $region1: #{tpu_custom_call.1} parent=0
    #allocation2 [shape = 'u8[8192]{0}', space=vmem, size = 0x2000, scoped, tag = 'input window, operand 0, single buffered']
    #allocation3 [shape = 's32[1]{0}', space=sflag, size = 0x4, scoped, tag = 'scoped memory for tpu_custom_call.1']
    #allocation4 [shape = 's32[1]{0}', space=sflag, size = 0x4, scoped, tag = 'scoped memory for tpu_custom_call.1']
    #allocation5 [shape = 'u8[8192]{0}', space=vmem, size = 0x2000, scoped, tag = 'output window, operand 0, single buffered']
    %6 = vsyncpa [#allocation3], 0
    %7 = vsyncpa [#allocation4], 0
    // Predicated region
    $region2: #{tpu_custom_call.1} parent=1 // pred_check
      _
    $region3: #{tpu_custom_call.1} parent=1 // pred_check_branch
      %9 = sbr.rel (0) target = $region5
    $region4: #{tpu_custom_call.1} parent=1 // pred_region
      %s11 = ssub.s32 256, 256
      %12 = vsyncadd [#allocation3], %s11
      %s14 = sshll.u32 [#allocation2], 4
      %s15 = int_to_ptr.vmem [resolvable:$true] %s14
      %17 = dma.hbm_to_vmem [thread:$0]  %s0, 256, %s15, [#allocation3]
    $region5: #{tpu_custom_call.1} parent=1 // pred_fallthru
      _
    // Predicated region
    $region6: #{tpu_custom_call.1} parent=1 // pred_check
      _
    $region7: #{tpu_custom_call.1} parent=1 // pred_check_branch
      %19 = sbr.rel (0) target = $region9
    $region8: #{tpu_custom_call.1} parent=1 // pred_region
      %20 = dma.done [#allocation3], 256
    $region9: #{tpu_custom_call.1} parent=1 // pred_fallthru
      _
    %v21 = vld [vmem:[#allocation2] sm:$0xff]
    %v22 = vld [vmem:[#allocation2 + $0x8] sm:$0xff]
    %v23 = vsub.f32 %v21, 0.5
    %v24 = vsub.f32 %v22, 0.5
    %25 = vst [vmem:[#allocation5] sm:$0xff] %v23
    %26 = vst [vmem:[#allocation5 + $0x8] sm:$0xff] %v24
    // Predicated region
    $region10: #{tpu_custom_call.1} parent=1 // pred_check
      _
    $region11: #{tpu_custom_call.1} parent=1 // pred_check_branch
      %28 = sbr.rel (0) target = $region13
    $region12: #{tpu_custom_call.1} parent=1 // pred_region
      %s30 = ssub.s32 256, 256
      %31 = vsyncadd [#allocation4], %s30
      %s33 = sshll.u32 [#allocation5], 4
      %s34 = int_to_ptr.vmem [resolvable:$true] %s33
      %36 = dma.vmem_to_hbm [thread:$0]  %s34, 256, %s1, [#allocation4]
    $region13: #{tpu_custom_call.1} parent=1 // pred_fallthru
      _
    // Predicated region
    $region14: #{tpu_custom_call.1} parent=1 // pred_check
      _
    $region15: #{tpu_custom_call.1} parent=1 // pred_check_branch
      %38 = sbr.rel (0) target = $region17
    $region16: #{tpu_custom_call.1} parent=1 // pred_region
      %39 = dma.done [#allocation4], 256
    $region17: #{tpu_custom_call.1} parent=1 // pred_fallthru
      _
    %40 = vsyncpa [#allocation3], 1
    %41 = vsyncpa [#allocation4], 1

</llo_original>
